<compile_context>
chip_gen: v5e
topology: v5e:2x2
jax: 0.10.0
libtpu: 0.0.40
codegen_flags: <defaults>
</compile_context>

<pallas_src>
import functools

import jax
import jax.numpy as jnp
import numpy as np
from jax import lax
from jax.experimental import pallas as pl
from jax.experimental.pallas import tpu as pltpu


_LANE = 128
# Per-block byte budget for one x block in its *native* dtype.  Pallas
# double-buffers both the input and the output block, so the streamed working
# set is ~ 2(bufs) * 2(in+out) * budget = 8 MiB, leaving headroom for the f32
# temporaries inside the kernel on every TPU generation, while still giving
# >=512-lane tiles (85-86% of HBM roofline in measured streaming kernels) for
# any C <= 1024 in f32.
_BLOCK_BYTE_BUDGET = 2 * 1024 * 1024
_BASE_VMEM_LIMIT = 32 * 1024 * 1024     # safe default on v5e / v6e / v7x
_MAX_VMEM_LIMIT = 48 * 1024 * 1024      # never exceed (v7x physical = 64 MiB)


# ----------------------------------------------------------------------------
# Kernel: fused RMSNorm over the channel axis for one (batch-tile, spatial-tile).
# ----------------------------------------------------------------------------
def _rmsnorm_kernel(x_ref, w_ref, o_ref, *, eps):
    # x_ref : (B_T, C, T)  activations (f32 or bf16), spatial on the lane axis
    # w_ref : (1,  C, 1)   per-channel weight, f32
    # o_ref : (B_T, C, T)
    x = x_ref[...].astype(jnp.float32)                 # f32 accumulation
    ms = jnp.mean(x * x, axis=1, keepdims=True)        # (B_T, 1, T) mean over C
    inv = lax.rsqrt(ms + eps)                          # EUP rsqrt (free slot)
    o_ref[...] = (x * inv * w_ref[...]).astype(o_ref.dtype)


# ----------------------------------------------------------------------------
# Tiling policy
# ----------------------------------------------------------------------------
def _round_down_to_lane(v):
    return max(_LANE, (v // _LANE) * _LANE)


def _choose_tiling(N, C, HW, itemsize):
    """Return (batch_tile, spatial_tile) obeying the per-block VMEM budget."""
    per_batch = C * HW * itemsize
    if per_batch <= _BLOCK_BYTE_BUDGET // 8:
        # Small spatial extent: amortize the per-step pipeline overhead by
        # packing several batch elements into one block (full HW on lanes).
        bt = max(1, min(N, _BLOCK_BYTE_BUDGET // max(1, per_batch)))
        if bt >= N and N > 1:
            bt = -(-N // 2)              # keep >=2 blocks for megacore / v7x
        return bt, HW

    # Large spatial extent: one batch element per block, tile H*W on lanes.
    t = _BLOCK_BYTE_BUDGET // max(1, C * itemsize)
    if t >= HW:
        t = HW
        if N == 1 and HW > 2 * _LANE:
            t = _round_down_to_lane(-(-HW // 2))   # >=2 spatial blocks
    else:
        t = _round_down_to_lane(t)
    return 1, t


# ----------------------------------------------------------------------------
# Wrapper
# ----------------------------------------------------------------------------
def rmsnorm(x, weight, eps=1e-6):
    """x: (N, C, H, W) float; weight: (C,) or (1, C, 1, 1). Returns like x."""
    N, C, H, W = x.shape
    HW = H * W
    itemsize = jnp.dtype(x.dtype).itemsize

    bt, t = _choose_tiling(N, C, HW, itemsize)
    nb = pl.cdiv(N, bt)
    ns = pl.cdiv(HW, t)

    x2 = x.reshape(N, C, HW)
    w2 = jnp.asarray(weight).reshape(1, C, 1).astype(jnp.float32)

    # Scoped-VMEM limit: fixed safe default; only raised (capped) for large C
    # where the lane-aligned minimum tile is already big.
    blk_f32 = bt * C * t * 4
    vmem_limit = int(max(_BASE_VMEM_LIMIT, min(_MAX_VMEM_LIMIT, 6 * blk_f32)))

    out = pl.pallas_call(
        functools.partial(_rmsnorm_kernel, eps=eps),
        out_shape=jax.ShapeDtypeStruct((N, C, HW), x.dtype),
        grid=(nb, ns),
        in_specs=[
            pl.BlockSpec((bt, C, t), lambda b, s: (b, 0, s)),
            pl.BlockSpec((1, C, 1), lambda b, s: (0, 0, 0)),
        ],
        out_specs=pl.BlockSpec((bt, C, t), lambda b, s: (b, 0, s)),
        compiler_params=pltpu.CompilerParams(
            dimension_semantics=("parallel", "parallel"),
            vmem_limit_bytes=vmem_limit),
    )(x2, w2)

    return out.reshape(N, C, H, W)


# ----------------------------------------------------------------------------
# Pure-JAX reference for correctness check.
# ----------------------------------------------------------------------------
def reference(x, weight, eps=1e-6):
    xf = x.astype(jnp.float32)
    w = jnp.asarray(weight).reshape(1, -1, 1, 1).astype(jnp.float32)
    ms = jnp.mean(xf * xf, axis=1, keepdims=True)
    return (xf * lax.rsqrt(ms + eps) * w).astype(x.dtype)


if __name__ == "__main__":
    key = jax.random.PRNGKey(0)
    k_x, k_w, k_x2 = jax.random.split(key, 3)

    # Primary check: small shape consistent with the module (batch=2, C=4, 16x16).
    N, C, H, W = 2, 4, 16, 16
    x = jax.random.normal(k_x, (N, C, H, W), jnp.float32)
    weight = jax.random.uniform(k_w, (C,), jnp.float32, 0.5, 1.5)

    out = jax.block_until_ready(rmsnorm(x, weight, eps=1e-6))
    ref = jax.block_until_ready(reference(x, weight, eps=1e-6))
    np.testing.assert_allclose(np.asarray(out), np.asarray(ref),
                               rtol=1e-5, atol=1e-5)

    # Secondary check: bf16 I/O and a non-128-multiple spatial extent.
    xb = jax.random.normal(k_x2, (1, 16, 12, 12), jnp.float32).astype(jnp.bfloat16)
    wb = jax.random.uniform(k_w, (16,), jnp.float32, 0.5, 1.5)
    outb = jax.block_until_ready(rmsnorm(xb, wb, eps=1e-6))
    refb = jax.block_until_ready(reference(xb, wb, eps=1e-6))
    np.testing.assert_allclose(np.asarray(outb, dtype=np.float32),
                               np.asarray(refb, dtype=np.float32),
                               rtol=2e-2, atol=2e-2)

    print("KERNEL_OK")
</pallas_src>

<mosaic_0001>
module attributes {stable_mosaic.version = 11 : i64} {
  func.func @_rmsnorm_kernel(%arg0: i32, %arg1: i32, %arg2: memref<1x4x256xf32, #tpu.memory_space<vmem>>, %arg3: memref<1x4x1xf32, #tpu.memory_space<vmem>>, %arg4: memref<1x4x256xf32, #tpu.memory_space<vmem>>) attributes {dimension_semantics = [#tpu.dimension_semantics<parallel>, #tpu.dimension_semantics<parallel>], iteration_bounds = array<i64: 2, 1>, scalar_prefetch = 0 : i64, scratch_operands = 0 : i64, tpu.core_type = #tpu.core_type<tc>, window_params = [{transform_indices = @transform_0, window_bounds = array<i64: 1, 4, 256>}, {pipeline_mode = #tpu.pipeline_mode<synchronous>, transform_indices = @transform_1, window_bounds = array<i64: 1, 4, 1>}, {transform_indices = @transform_2, window_bounds = array<i64: 1, 4, 256>}]} {
    %c0 = arith.constant 0 : index
    %c0_0 = arith.constant 0 : index
    %c0_1 = arith.constant 0 : index
    %0 = vector.load %arg2[%c0, %c0_0, %c0_1] : memref<1x4x256xf32, #tpu.memory_space<vmem>>, vector<1x4x256xf32>
    %1 = arith.mulf %0, %0 : vector<1x4x256xf32>
    %cst = arith.constant dense<0.000000e+00> : vector<1x256xf32>
    %2 = vector.multi_reduction <add>, %1, %cst [1] : vector<1x4x256xf32> to vector<1x256xf32>
    %3 = vector.shape_cast %2 : vector<1x256xf32> to vector<1x1x256xf32>
    %cst_2 = arith.constant 4.000000e+00 : f32
    %4 = vector.broadcast %cst_2 : f32 to vector<1x1x256xf32>
    %5 = arith.divf %3, %4 : vector<1x1x256xf32>
    %cst_3 = arith.constant 9.99999997E-7 : f32
    %6 = vector.broadcast %cst_3 : f32 to vector<1x1x256xf32>
    %7 = arith.addf %5, %6 : vector<1x1x256xf32>
    %8 = math.rsqrt %7 : vector<1x1x256xf32>
    %9 = vector.broadcast %8 : vector<1x1x256xf32> to vector<1x4x256xf32>
    %10 = arith.mulf %0, %9 : vector<1x4x256xf32>
    %c0_4 = arith.constant 0 : index
    %c0_5 = arith.constant 0 : index
    %c0_6 = arith.constant 0 : index
    %11 = vector.load %arg3[%c0_4, %c0_5, %c0_6] : memref<1x4x1xf32, #tpu.memory_space<vmem>>, vector<1x4x1xf32>
    %12 = vector.broadcast %11 : vector<1x4x1xf32> to vector<1x4x256xf32>
    %13 = arith.mulf %10, %12 : vector<1x4x256xf32>
    %c0_7 = arith.constant 0 : index
    %c0_8 = arith.constant 0 : index
    %c0_9 = arith.constant 0 : index
    %14 = vector.load %arg4[%c0_7, %c0_8, %c0_9] : memref<1x4x256xf32, #tpu.memory_space<vmem>>, vector<1x4x256xf32>
    tpu.vector_store %arg4[%c0_7, %c0_8, %c0_9], %13 {strides = array<i32>} : memref<1x4x256xf32, #tpu.memory_space<vmem>>, vector<1x4x256xf32>,
    return
  }
  func.func @transform_0(%arg0: i32, %arg1: i32) -> (i32, i32, i32) {
    %c0_i32 = arith.constant 0 : i32
    %c0_i32_0 = arith.constant 0 : i32
    return %arg0, %c0_i32, %arg1 : i32, i32, i32
  }
  func.func @transform_1(%arg0: i32, %arg1: i32) -> (i32, i32, i32) {
    %c0_i32 = arith.constant 0 : i32
    %c0_i32_0 = arith.constant 0 : i32
    %c0_i32_1 = arith.constant 0 : i32
    %c0_i32_2 = arith.constant 0 : i32
    return %c0_i32, %c0_i32_0, %c0_i32_1 : i32, i32, i32
  }
  func.func @transform_2(%arg0: i32, %arg1: i32) -> (i32, i32, i32) {
    %c0_i32 = arith.constant 0 : i32
    %c0_i32_0 = arith.constant 0 : i32
    return %arg0, %c0_i32, %arg1 : i32, i32, i32
  }
}

</mosaic_0001>

<llo_original>
// kernel: tpu_custom_call.1
$region0: #{tpu_custom_call.1}
  #allocation0 [shape = 'u32[]', space=smem, size = 0x4, offset = 0x4, fixed_abs, tag = 'smem constant byte address 0x4 - core index']
  #allocation1 [shape = 'u32[72,128]{1,0:T(1,128)}', space=vmem, size = 0x9000, scoped, tag = 'internal scratch']
  %s0 = inlined_call_operand.hbm [shape: f32[2,4,256], index: 0, kind: input, shape index: {}]
  %s1 = inlined_call_operand.vmem [shape: f32[1,4,1], index: 1, kind: input, shape index: {}]
  %s2 = inlined_call_operand.hbm [shape: f32[2,4,256], index: 2, kind: output, shape index: {}]
  %s3 = sld [smem:[#allocation0]]
  $region45: #{tpu_custom_call.1} parent=0
    _
  %s5 = ssub.s32 1, %s3
  %s6 = scalar_select 0, %s5, %s3
  $region1: #{tpu_custom_call.1} parent=0
    #allocation2 [shape = 'u8[8192]{0}', space=vmem, size = 0x2000, scoped, tag = 'input window, operand 0']
    #allocation3 [shape = 's32[2]{0}', space=sflag, size = 0x8, scoped, tag = 'scoped memory for tpu_custom_call.1']
    #allocation4 [shape = 's32[2]{0}', space=sflag, size = 0x8, scoped, tag = 'scoped memory for tpu_custom_call.1']
    #allocation5 [shape = 'u8[8192]{0}', space=vmem, size = 0x2000, scoped, tag = 'output window, operand 0']
    %7 = vsyncpa [#allocation3], 0
    %s8 = scalar_lea.sflag [#allocation3], 1
    %9 = vsyncpa %s8, 0
    %10 = vsyncpa [#allocation4], 0
    %s11 = scalar_lea.sflag [#allocation4], 1
    %12 = vsyncpa %s11, 0
    loop: start=0, step=1, limit=4
    $region2: #{tpu_custom_call.1} parent=1 // loop_pre_header
      _
    $region3: #{tpu_custom_call.1} parent=1 // loop_header
      %s14 = sphi 0, %s18
      %p15 = scmp.ge.s32.totalorder %s14, 4
      %s21 = sphi 0, %s33
      %s22 = sphi 0, %s29
      %s23 = sphi 0, %s21
      %s24 = sphi 0, %s22
      %s25 = sphi 0, %s23
      %s26 = sphi 0, %s24
      %s38 = sphi 0, %s40
      %s41 = sphi 0, %s38
      %s42 = sphi 0, %s41
      %s58 = sphi 0, %s42
      %s62 = sphi 0, %s62
      %s64 = sphi 0, %s62
      %s65 = sphi 0, %s64
      %s79 = sphi 0, %s65
      %s87 = sphi 0, %s89
      %s90 = sphi 0, %s87
      %s91 = sphi 0, %s90
      %s107 = sphi 0, %s91
    $region4: #{tpu_custom_call.1} parent=1 // loop_header_branch
      %17 = sbr.rel (%p15) target = $region8
    $region5: #{tpu_custom_call.1} parent=1 // loop_body
      %s19 = ssub.s32 %s14, 1
      %s20 = ssub.s32 %s14, 2
      %s27 = sadd.s32 1, %s22
      %p28 = scmp.ge.s32.totalorder %s27, 1
      %s29 = scalar_select %p28, 0, %s27
      %s30 = sadd.s32 1, %s21
      %s31 = scalar_select %p28, %s30, %s21
      %p32 = scmp.ge.s32.totalorder %s31, 2
      %s33 = scalar_select %p32, 0, %s31
      %s34 = ssub.s32 %s21, %s33
      %s35 = ssub.s32 %s22, %s29
      %s36 = sor.u32 %s34, %s35
      %p37 = scmp.eq.s32.totalorder %s36, 0
      %s39 = sadd.s32 %s38, 1
      %s40 = scalar_select %p37, %s38, %s39
      %p43 = pneg %p37
      %p44 = scmp.eq.s32.totalorder %s14, 1
      %p45 = por %p43, %p44
      %p46 = scmp.ne.s32.totalorder %s38, %s41
      %p47 = scmp.eq.s32.totalorder %s14, 0
      %p48 = por %p46, %p47
      %p49 = scmp.ne.s32.totalorder %s38, %s41
      %p50 = scmp.eq.s32.totalorder %s19, 1
      %p51 = por %p49, %p50
      %p52 = scmp.ne.s32.totalorder %s41, %s42
      %p53 = scmp.eq.s32.totalorder %s19, 0
      %p54 = por %p52, %p53
      %p55 = scmp.ne.s32.totalorder %s41, %s42
      %p56 = scmp.eq.s32.totalorder %s20, 1
      %p57 = por %p55, %p56
      %p59 = scmp.ne.s32.totalorder %s42, %s58
      %p60 = scmp.eq.s32.totalorder %s20, 0
      %p61 = por %p59, %p60
      %s63 = sadd.s32 %s62, 1
      %p66 = scmp.eq.s32.totalorder %s14, 1
      %p67 = scmp.ne.s32.totalorder %s62, %s64
      %p68 = scmp.eq.s32.totalorder %s14, 0
      %p69 = por %p67, %p68
      %p70 = scmp.ne.s32.totalorder %s62, %s64
      %p71 = scmp.eq.s32.totalorder %s19, 1
      %p72 = por %p70, %p71
      %p73 = scmp.ne.s32.totalorder %s64, %s65
      %p74 = scmp.eq.s32.totalorder %s19, 0
      %p75 = por %p73, %p74
      %p76 = scmp.ne.s32.totalorder %s64, %s65
      %p77 = scmp.eq.s32.totalorder %s20, 1
      %p78 = por %p76, %p77
      %p80 = scmp.ne.s32.totalorder %s65, %s79
      %p81 = scmp.eq.s32.totalorder %s20, 0
      %p82 = por %p80, %p81
      %s83 = ssub.s32 %s21, %s33
      %s84 = ssub.s32 %s22, %s29
      %s85 = sor.u32 %s83, %s84
      %p86 = scmp.eq.s32.totalorder %s85, 0
      %s88 = sadd.s32 %s87, 1
      %s89 = scalar_select %p86, %s87, %s88
      %p92 = pneg %p86
      %p93 = scmp.eq.s32.totalorder %s14, 1
      %p94 = por %p92, %p93
      %p95 = scmp.ne.s32.totalorder %s87, %s90
      %p96 = scmp.eq.s32.totalorder %s14, 0
      %p97 = por %p95, %p96
      %p98 = scmp.ne.s32.totalorder %s87, %s90
      %p99 = scmp.eq.s32.totalorder %s19, 1
      %p100 = por %p98, %p99
      %p101 = scmp.ne.s32.totalorder %s90, %s91
      %p102 = scmp.eq.s32.totalorder %s19, 0
      %p103 = por %p101, %p102
      %p104 = scmp.ne.s32.totalorder %s90, %s91
      %p105 = scmp.eq.s32.totalorder %s20, 1
      %p106 = por %p104, %p105
      %p108 = scmp.ne.s32.totalorder %s91, %s107
      %p109 = scmp.eq.s32.totalorder %s20, 0
      %p110 = por %p108, %p109
      %p111 = scmp.le.s32.totalorder 1, %s14
      %p112 = scmp.lt.s32.totalorder %s14, 3
      %p113 = pnand %p111, %p112
      %p114 = pneg %p113
      // Predicated region
      $region9: #{tpu_custom_call.1} parent=5 // pred_check
        _
      $region10: #{tpu_custom_call.1} parent=5 // pred_check_branch
        %116 = sbr.rel (%p113) target = $region12
      $region11: #{tpu_custom_call.1} parent=5 // pred_region
        %s117 = ssub.s32 %s14, 1
        // Predicated region
        $region13: #{tpu_custom_call.1} parent=11 // pred_check
          %p118 = pneg %p75
        $region14: #{tpu_custom_call.1} parent=11 // pred_check_branch
          %120 = sbr.rel (%p118) target = $region16
        $region15: #{tpu_custom_call.1} parent=11 // pred_region
          _
        $region16: #{tpu_custom_call.1} parent=11 // pred_fallthru
          _
      $region12: #{tpu_custom_call.1} parent=5 // pred_fallthru
        _
      %p121 = scmp.lt.s32.totalorder %s14, 2
      // Predicated region
      $region17: #{tpu_custom_call.1} parent=5 // pred_check
        %p122 = pneg %p121
      $region18: #{tpu_custom_call.1} parent=5 // pred_check_branch
        %124 = sbr.rel (%p122) target = $region20
      $region19: #{tpu_custom_call.1} parent=5 // pred_region
        // Predicated region
        $region21: #{tpu_custom_call.1} parent=19 // pred_check
          %p125 = pneg %p48
        $region22: #{tpu_custom_call.1} parent=19 // pred_check_branch
          %127 = sbr.rel (%p125) target = $region24
        $region23: #{tpu_custom_call.1} parent=19 // pred_region
          %s128 = sand.u32 %s38, 1
          %s129 = scalar_lea.sflag [#allocation3], %s128
          %s130 = sand.u32 %s38, 1
          %s131 = smul.addr %s130, 8
          %s132 = scalar_lea.vmem [#allocation2], %s131
          %s133 = smul.u32 2, %s22
          %135 = vsyncadd %s129, 0
          %s136 = smul.addr %s21, 2
          %s137 = sadd.s32 %s133, %s136
          %s138 = smul.addr %s137, 4
          %s139 = scalar_lea.hbm %s0, %s138
          %s141 = sshll.u32 %s139, 4
          %s142 = int_to_ptr.hbm [resolvable:$true] %s141
          %s143 = sshll.u32 %s132, 4
          %s144 = int_to_ptr.vmem [resolvable:$true] %s143
          %146 = dma.hbm_to_vmem [thread:$0]  %s142, 128, %s144, %s129
        $region24: #{tpu_custom_call.1} parent=19 // pred_fallthru
          _
      $region20: #{tpu_custom_call.1} parent=5 // pred_fallthru
        _
      %p147 = scmp.le.s32.totalorder 1, %s14
      %p148 = scmp.lt.s32.totalorder %s14, 3
      %p149 = pnand %p147, %p148
      %p150 = pneg %p149
      // Predicated region
      $region25: #{tpu_custom_call.1} parent=5 // pred_check
        _
      $region26: #{tpu_custom_call.1} parent=5 // pred_check_branch
        %152 = sbr.rel (%p149) target = $region28
      $region27: #{tpu_custom_call.1} parent=5 // pred_region
        %s153 = ssub.s32 %s14, 1
        %s154 = sand.u32 %s41, 1
        %s155 = scalar_lea.sflag [#allocation3], %s154
        %s156 = sand.u32 %s41, 1
        %s157 = smul.addr %s156, 8
        %s158 = scalar_lea.vmem [#allocation2], %s157
        // Predicated region
        $region29: #{tpu_custom_call.1} parent=27 // pred_check
          %p159 = pneg %p54
        $region30: #{tpu_custom_call.1} parent=27 // pred_check_branch
          %161 = sbr.rel (%p159) target = $region32
        $region31: #{tpu_custom_call.1} parent=27 // pred_region
          %163 = dma.done %s155, 128
        $region32: #{tpu_custom_call.1} parent=27 // pred_fallthru
          _
        %s164 = sand.u32 %s41, 1
        %s165 = scalar_lea.sflag [#allocation3], %s164
        %s166 = sand.u32 %s41, 1
        %s167 = smul.addr %s166, 8
        %s168 = scalar_lea.vmem [#allocation2], %s167
        %p169 = pneg %p54
        %p170 = pneg %p51
        %p171 = pneg %p75
        %p172 = pneg %p72
        %p173 = pneg %p103
        %p174 = pneg %p100
        %s175 = sand.u32 %s90, 1
        %s176 = scalar_lea.sflag [#allocation4], %s175
        %s177 = sand.u32 %s90, 1
        %s178 = smul.addr %s177, 8
        %s179 = scalar_lea.vmem [#allocation5], %s178
        %s180 = smul.u32 2, %s24
        %s181 = smul.u32 2, %s24
        %v182 = vld [vmem:[%s158] sm:$0xff]
        %v183 = vmul.f32 %v182, %v182
        %185 = vst [vmem:[#allocation1] ss:$2 sm:$0xff] %v183
        %v186 = vld.sshfl [vmem:[#allocation1] sm:$0xff pattern:$0x75316420]
        %v187 = vld.sshfl [vmem:[#allocation1 + $0x8] sm:$0xff pattern:$0x75316420]
        %vm190 = vcmask 1043456
        %v191 = vsel %vm190, %v186, 0.0
        %v192 = vrot.slane %v191, 4
        %v193 = vadd.f32 %v191, %v192
        %v194 = vrot.slane %v193, 2
        %v195 = vadd.f32 %v193, %v194
        %v196 = vrot.slane %v195, 1
        %v197 = vadd.f32 %v195, %v196
        %v198 = vsel %vm190, %v187, 0.0
        %v199 = vrot.slane %v198, 4
        %v200 = vadd.f32 %v198, %v199
        %v201 = vrot.slane %v200, 2
        %v202 = vadd.f32 %v200, %v201
        %v203 = vrot.slane %v202, 1
        %v204 = vadd.f32 %v202, %v203
        %v205 = vrcp.pop 4.0
        %v206 = vmul.f32 4.0, %v205
        %v207 = vsub.f32 1.0, %v206
        %v208 = vmul.f32 %v205, %v207
        %v209 = vadd.f32 %v205, %v208
        %vm210 = vweird.f32 %v205
        %v211 = vsel %vm210, %v205, %v209
        %v212 = vmul.f32 %v197, %v211
        %v213 = vmul.f32 %v204, %v211
        %v214 = vadd.f32 %v212, 1e-06
        %v215 = vadd.f32 %v213, 1e-06
        %v216 = vrsqrt.pop %v214
        %v217 = vmul.f32 %v216, %v214
        %v218 = vmul.f32 %v217, %v216
        %v219 = vmul.f32 0.5, %v218
        %v220 = vsub.f32 1.5, %v219
        %v221 = vmul.f32 %v216, %v220
        %vm222 = vweird.f32 %v214
        %vm223 = vweird.f32 %v216
        %vm224 = vmor %vm222, %vm223
        %v225 = vsel %vm224, %v216, %v221
        %v226 = vrsqrt.pop %v215
        %v227 = vmul.f32 %v226, %v215
        %v228 = vmul.f32 %v227, %v226
        %v229 = vmul.f32 0.5, %v228
        %v230 = vsub.f32 1.5, %v229
        %v231 = vmul.f32 %v226, %v230
        %vm232 = vweird.f32 %v215
        %vm233 = vweird.f32 %v226
        %vm234 = vmor %vm232, %vm233
        %v235 = vsel %vm234, %v226, %v231
        %v238 = vrot.slane %v235, 4
        %v239 = vsel %vm190, %v225, %v238
        %v241 = vmul.f32 %v182, %v239
        %v242 = vld [vmem:[%s1] sm:$0xf]
        %244 = vset.pattern.permute.xlu0 0
        %245 = vperm.xlu0 %244, %v242
        %v246 = vpop.permute.xlu0 %245
        %v248 = vunpack.c.l.s4 839922192
        %v249 = vunpack.c.0.s8 %v248
        %v250 = vperm.slane %v246, %v249
        %v252 = vmul.f32 %v241, %v250
        %253 = vst [vmem:[%s179] sm:$0xff] %v252
        %s254 = sand.u32 %s90, 1
        %s255 = scalar_lea.sflag [#allocation4], %s254
        %s256 = sand.u32 %s90, 1
        %s257 = smul.addr %s256, 8
        %s258 = scalar_lea.vmem [#allocation5], %s257
        // Predicated region
        $region33: #{tpu_custom_call.1} parent=27 // pred_check
          %p259 = pneg %p100
        $region34: #{tpu_custom_call.1} parent=27 // pred_check_branch
          %261 = sbr.rel (%p259) target = $region36
        $region35: #{tpu_custom_call.1} parent=27 // pred_region
          %s262 = smul.u32 2, %s24
          %264 = vsyncadd %s255, 0
          %s265 = smul.addr %s23, 2
          %s266 = sadd.s32 %s262, %s265
          %s267 = smul.addr %s266, 4
          %s268 = scalar_lea.hbm %s2, %s267
          %s270 = sshll.u32 %s258, 4
          %s271 = int_to_ptr.vmem [resolvable:$true] %s270
          %s272 = sshll.u32 %s268, 4
          %s273 = int_to_ptr.hbm [resolvable:$true] %s272
          %275 = dma.vmem_to_hbm [thread:$0]  %s271, 128, %s273, %s255
        $region36: #{tpu_custom_call.1} parent=27 // pred_fallthru
          _
      $region28: #{tpu_custom_call.1} parent=5 // pred_fallthru
        _
      %p276 = scmp.le.s32.totalorder 2, %s14
      // Predicated region
      $region37: #{tpu_custom_call.1} parent=5 // pred_check
        %p277 = pneg %p276
      $region38: #{tpu_custom_call.1} parent=5 // pred_check_branch
        %279 = sbr.rel (%p277) target = $region40
      $region39: #{tpu_custom_call.1} parent=5 // pred_region
        %s280 = ssub.s32 %s14, 2
        // Predicated region
        $region41: #{tpu_custom_call.1} parent=39 // pred_check
          %p281 = pneg %p106
        $region42: #{tpu_custom_call.1} parent=39 // pred_check_branch
          %283 = sbr.rel (%p281) target = $region44
        $region43: #{tpu_custom_call.1} parent=39 // pred_region
          %s284 = sand.u32 %s91, 1
          %s285 = scalar_lea.sflag [#allocation4], %s284
          %s286 = sand.u32 %s91, 1
          %s287 = smul.addr %s286, 8
          %s288 = scalar_lea.vmem [#allocation5], %s287
          %290 = dma.done %s285, 128
        $region44: #{tpu_custom_call.1} parent=39 // pred_fallthru
          _
      $region40: #{tpu_custom_call.1} parent=5 // pred_fallthru
        _
    $region6: #{tpu_custom_call.1} parent=1 // loop_footer
      %s18 = sadd.s32 1, %s14
    $region7: #{tpu_custom_call.1} parent=1 // loop_footer_branch
      %13 = sbr.rel target = $region3
    $region8: #{tpu_custom_call.1} parent=1 // loop_exit
      _
    %291 = vsyncpa [#allocation3], 1
    %s292 = scalar_lea.sflag [#allocation3], 1
    %293 = vsyncpa %s292, 1
    %294 = vsyncpa [#allocation4], 1
    %s295 = scalar_lea.sflag [#allocation4], 1
    %296 = vsyncpa %s295, 1

</llo_original>
